<compile_context>
chip_gen: v5e
topology: v5e:2x2
jax: 0.10.0
libtpu: 0.0.40
codegen_flags: <defaults>
</compile_context>

<pallas_src>
import functools

import jax
import jax.numpy as jnp
from jax import lax
from jax.experimental import pallas as pl
from jax.experimental.pallas import tpu as pltpu


_DIRECT_TAP_MAX_K = 8   # <= 8 taps: direct rolled-tap sum; larger: prefix sum


def _cdiv(a, b):
    return -(-a // b)


def _round_up(a, b):
    return _cdiv(a, b) * b


def _roll_lanes(x, shift):
    """np.roll semantics along the last (lane) axis; shift may be negative."""
    n = x.shape[-1]
    s = shift % n
    if s == 0:
        return x
    return pltpu.roll(x, s, x.ndim - 1)


def _decomp_kernel(x_ref, res_ref, mean_ref, *, k, pad, L, L_pad, L_work):
    rows = x_ref.shape[0]
    xw = x_ref[...].astype(jnp.float32)           # (rows, L_work); lanes >= L are 0
    lane = lax.broadcasted_iota(jnp.int32, (rows, L_work), 1)

    # Edge-replicated padded series built as a register value (no scratch,
    # no interior VMEM copy): shift x right by `pad` lanes on the XLU, then
    # select the two replicated edge regions.
    xpad = _roll_lanes(xw, pad)                   # x[i] now sits at lane i + pad
    if pad > 0:
        x_first = xw[:, 0:1]
        x_last = xw[:, L - 1:L]
        xpad = jnp.where(lane < pad, x_first, xpad)
        xpad = jnp.where(lane >= pad + L, x_last, xpad)

    inv_k = jnp.float32(1.0 / k)
    if k <= _DIRECT_TAP_MAX_K:
        # Small k: rolled taps accumulated into 4 independent partial sums
        # (breaks the serial VALU dependency chain).
        n_parts = min(4, k)
        parts = [None] * n_parts
        for j in range(k):
            tap = xpad if j == 0 else _roll_lanes(xpad, -j)
            i = j % n_parts
            parts[i] = tap if parts[i] is None else parts[i] + tap
        acc = parts[0]
        for p in parts[1:]:
            acc = acc + p
        mean = acc * inv_k
    else:
        # Large k: Hillis-Steele inclusive prefix sum along lanes (O(log L)
        # XLU rolls + VALU adds), then moving sum = cs[t+k-1] - cs[t-1].
        cs = xpad
        shift = 1
        while shift < L_pad:
            cs = cs + jnp.where(lane >= shift, _roll_lanes(cs, shift), 0.0)
            shift *= 2
        upper = _roll_lanes(cs, -(k - 1))                       # cs[t + k - 1]
        lower = jnp.where(lane >= 1, _roll_lanes(cs, 1), 0.0)   # cs[t - 1]
        mean = (upper - lower) * inv_k
    # Lanes >= L_out hold don't-care values; the wrapper slices them off.

    res = xw - mean
    res_ref[...] = res.astype(res_ref.dtype)
    mean_ref[...] = mean.astype(mean_ref.dtype)


def series_decomp(x, kernel_size: int, *, rows_per_block: int = 512,
                  time_last: bool = False):
    """Pallas port of the PyTorch series_decomp module.

    x: (B, L, C).  Returns (res, moving_mean), each (B, L_out, C) where
    L_out == L for odd kernel_size (the DLinear case).  With time_last=True
    outputs are returned as (B, C, L_out), skipping two HBM transpose passes.
    """
    B, L, C = x.shape
    k = int(kernel_size)
    if k < 1:
        raise ValueError("kernel_size must be >= 1")
    pad = (k - 1) // 2
    L_pad = L + 2 * pad
    L_out = L_pad - k + 1          # == L for odd k

    # Lane-dense layout: time on the 128-lane axis, padded to a lane multiple
    # so every store in the kernel is a full unmasked vst.
    L_work = _round_up(L_pad, 128)
    R = B * C

    # Row tiling: large blocks for pipelining efficiency, sublane rounding per
    # dtype, even grid count (when > 1) for v7x's two TensorCores.
    itemsize = jnp.dtype(x.dtype).itemsize
    sub = max(8, 32 // max(itemsize, 1))
    G = _cdiv(R, rows_per_block)
    if G > 1 and G % 2 == 1:
        G += 1
    TR = _round_up(_cdiv(R, G), sub)
    R_padded = G * TR

    xt = jnp.transpose(x, (0, 2, 1)).reshape(R, L)
    xt = jnp.pad(xt, ((0, R_padded - R), (0, L_work - L)))

    kernel = functools.partial(
        _decomp_kernel, k=k, pad=pad, L=L, L_pad=L_pad, L_work=L_work)

    res_t, mean_t = pl.pallas_call(
        kernel,
        out_shape=(
            jax.ShapeDtypeStruct((R_padded, L_work), x.dtype),   # res
            jax.ShapeDtypeStruct((R_padded, L_work), x.dtype),   # moving_mean
        ),
        grid_spec=pltpu.PrefetchScalarGridSpec(
            num_scalar_prefetch=0,
            grid=(G,),
            in_specs=[pl.BlockSpec((TR, L_work), lambda r: (r, 0))],
            out_specs=[
                pl.BlockSpec((TR, L_work), lambda r: (r, 0)),
                pl.BlockSpec((TR, L_work), lambda r: (r, 0)),
            ],
        ),
        compiler_params=pltpu.CompilerParams(
            dimension_semantics=("parallel",),
        ),
    )(xt)

    res = res_t[:R, :L_out].reshape(B, C, L_out)
    mean = mean_t[:R, :L_out].reshape(B, C, L_out)
    if time_last:
        return res, mean
    return jnp.transpose(res, (0, 2, 1)), jnp.transpose(mean, (0, 2, 1))


def _reference(x, kernel_size):
    """Pure-JAX reference replicating the PyTorch semantics."""
    k = kernel_size
    pad = (k - 1) // 2
    front = jnp.repeat(x[:, 0:1, :], pad, axis=1)
    end = jnp.repeat(x[:, -1:, :], pad, axis=1)
    xp = jnp.concatenate([front, x, end], axis=1)
    L_out = xp.shape[1] - k + 1
    mean = jnp.mean(
        jnp.stack([xp[:, j:j + L_out, :] for j in range(k)], axis=0), axis=0)
    return x[:, :L_out, :] - mean, mean


if __name__ == "__main__":
    key = jax.random.PRNGKey(0)
    k1, k2, k3 = jax.random.split(key, 3)

    def check(x, ksz, **kw):
        res, mean = series_decomp(x, ksz, **kw)
        res = jax.block_until_ready(res)
        mean = jax.block_until_ready(mean)
        res_ref, mean_ref = _reference(x, ksz)
        if kw.get("time_last", False):
            res_ref = jnp.transpose(res_ref, (0, 2, 1))
            mean_ref = jnp.transpose(mean_ref, (0, 2, 1))
        assert res.shape == res_ref.shape and mean.shape == mean_ref.shape
        assert jnp.allclose(res, res_ref, atol=1e-5, rtol=1e-5)
        assert jnp.allclose(mean, mean_ref, atol=1e-5, rtol=1e-5)

    # Direct-tap path (k <= 8).
    check(jax.random.normal(k1, (2, 16, 8), dtype=jnp.float32), 5)
    # Row-padding path (B*C not a multiple of 8), still direct taps.
    check(jax.random.normal(k2, (2, 20, 3), dtype=jnp.float32), 7)
    # Prefix-sum path (k > 8), plus the time-last layout option.
    x3 = jax.random.normal(k3, (2, 32, 5), dtype=jnp.float32)
    check(x3, 11)
    check(x3, 11, time_last=True)

    print("KERNEL_OK")
</pallas_src>

<mosaic_0001>
module attributes {stable_mosaic.version = 11 : i64} {
  func.func @_decomp_kernel(%arg0: i32, %arg1: memref<16x128xf32, #tpu.memory_space<vmem>>, %arg2: memref<16x128xf32, #tpu.memory_space<vmem>>, %arg3: memref<16x128xf32, #tpu.memory_space<vmem>>) attributes {dimension_semantics = [#tpu.dimension_semantics<parallel>], iteration_bounds = array<i64: 1>, scalar_prefetch = 0 : i64, scratch_operands = 0 : i64, tpu.core_type = #tpu.core_type<tc>, window_params = [{transform_indices = @transform_0, window_bounds = array<i64: 16, 128>}, {transform_indices = @transform_1, window_bounds = array<i64: 16, 128>}, {transform_indices = @transform_2, window_bounds = array<i64: 16, 128>}]} {
    %c0 = arith.constant 0 : index
    %c0_0 = arith.constant 0 : index
    %0 = vector.load %arg1[%c0, %c0_0] : memref<16x128xf32, #tpu.memory_space<vmem>>, vector<16x128xf32>
    %1 = tpu.iota {dimensions = array<i32: 1>} : vector<16x128xi32>
    %c2_i32 = arith.constant 2 : i32
    %2 = tpu.dynamic_rotate %0 by %c2_i32 dim 1 : vector<16x128xf32>, i32 -> vector<16x128xf32>
    %3 = vector.extract_strided_slice %0 {offsets = [0, 0], sizes = [16, 1], strides = [1, 1]} : vector<16x128xf32> to vector<16x1xf32>
    %4 = vector.extract_strided_slice %0 {offsets = [0, 15], sizes = [16, 1], strides = [1, 1]} : vector<16x128xf32> to vector<16x1xf32>
    %c2_i32_1 = arith.constant 2 : i32
    %5 = vector.broadcast %c2_i32_1 : i32 to vector<16x128xi32>
    %6 = arith.cmpi slt, %1, %5 : vector<16x128xi32>
    %7 = vector.shape_cast %3 : vector<16x1xf32> to vector<16x1xf32>
    %8 = vector.broadcast %7 : vector<16x1xf32> to vector<16x128xf32>
    %9 = arith.select %6, %8, %2 : vector<16x128xi1>, vector<16x128xf32>
    %c18_i32 = arith.constant 18 : i32
    %10 = vector.broadcast %c18_i32 : i32 to vector<16x128xi32>
    %11 = arith.cmpi sge, %1, %10 : vector<16x128xi32>
    %12 = vector.shape_cast %4 : vector<16x1xf32> to vector<16x1xf32>
    %13 = vector.broadcast %12 : vector<16x1xf32> to vector<16x128xf32>
    %14 = arith.select %11, %13, %9 : vector<16x128xi1>, vector<16x128xf32>
    %c127_i32 = arith.constant 127 : i32
    %15 = tpu.dynamic_rotate %14 by %c127_i32 dim 1 : vector<16x128xf32>, i32 -> vector<16x128xf32>
    %c126_i32 = arith.constant 126 : i32
    %16 = tpu.dynamic_rotate %14 by %c126_i32 dim 1 : vector<16x128xf32>, i32 -> vector<16x128xf32>
    %c125_i32 = arith.constant 125 : i32
    %17 = tpu.dynamic_rotate %14 by %c125_i32 dim 1 : vector<16x128xf32>, i32 -> vector<16x128xf32>
    %c124_i32 = arith.constant 124 : i32
    %18 = tpu.dynamic_rotate %14 by %c124_i32 dim 1 : vector<16x128xf32>, i32 -> vector<16x128xf32>
    %19 = arith.addf %14, %18 : vector<16x128xf32>
    %20 = arith.addf %19, %15 : vector<16x128xf32>
    %21 = arith.addf %20, %16 : vector<16x128xf32>
    %22 = arith.addf %21, %17 : vector<16x128xf32>
    %cst = arith.constant 2.000000e-01 : f32
    %23 = vector.broadcast %cst : f32 to vector<16x128xf32>
    %24 = arith.mulf %22, %23 : vector<16x128xf32>
    %25 = arith.subf %0, %24 : vector<16x128xf32>
    %c0_2 = arith.constant 0 : index
    %c0_3 = arith.constant 0 : index
    %26 = vector.load %arg2[%c0_2, %c0_3] : memref<16x128xf32, #tpu.memory_space<vmem>>, vector<16x128xf32>
    tpu.vector_store %arg2[%c0_2, %c0_3], %25 {strides = array<i32>} : memref<16x128xf32, #tpu.memory_space<vmem>>, vector<16x128xf32>,
    %c0_4 = arith.constant 0 : index
    %c0_5 = arith.constant 0 : index
    %27 = vector.load %arg3[%c0_4, %c0_5] : memref<16x128xf32, #tpu.memory_space<vmem>>, vector<16x128xf32>
    tpu.vector_store %arg3[%c0_4, %c0_5], %24 {strides = array<i32>} : memref<16x128xf32, #tpu.memory_space<vmem>>, vector<16x128xf32>,
    return
  }
  func.func @transform_0(%arg0: i32) -> (i32, i32) {
    %c0_i32 = arith.constant 0 : i32
    %c0_i32_0 = arith.constant 0 : i32
    return %arg0, %c0_i32 : i32, i32
  }
  func.func @transform_1(%arg0: i32) -> (i32, i32) {
    %c0_i32 = arith.constant 0 : i32
    %c0_i32_0 = arith.constant 0 : i32
    return %arg0, %c0_i32 : i32, i32
  }
  func.func @transform_2(%arg0: i32) -> (i32, i32) {
    %c0_i32 = arith.constant 0 : i32
    %c0_i32_0 = arith.constant 0 : i32
    return %arg0, %c0_i32 : i32, i32
  }
}

</mosaic_0001>

<llo_original>
// kernel: tpu_custom_call.1
$region0: #{tpu_custom_call.1}
  #allocation0 [shape = 'u32[]', space=smem, size = 0x4, offset = 0x4, fixed_abs, tag = 'smem constant byte address 0x4 - core index']
  #allocation1 [shape = 'u32[72,128]{1,0:T(1,128)}', space=vmem, size = 0x9000, scoped, tag = 'internal scratch']
  %s0 = inlined_call_operand.hbm [shape: f32[16,128], index: 0, kind: input, shape index: {}]
  %s1 = inlined_call_operand.hbm [shape: f32[16,128], index: 1, kind: output, shape index: {0}]
  %s2 = inlined_call_operand.hbm [shape: f32[16,128], index: 2, kind: output, shape index: {1}]
  %3 = xla_tuple %s1, %s2
  %s4 = sld [smem:[#allocation0]]
  $region26: #{tpu_custom_call.1} parent=0
    _
  %s6 = ssub.s32 1, %s4
  %s7 = scalar_select 0, %s6, %s4
  $region1: #{tpu_custom_call.1} parent=0
    #allocation2 [shape = 'u8[8192]{0}', space=vmem, size = 0x2000, scoped, tag = 'input window, operand 0, single buffered']
    #allocation3 [shape = 's32[1]{0}', space=sflag, size = 0x4, scoped, tag = 'scoped memory for tpu_custom_call.1']
    #allocation4 [shape = 's32[1]{0}', space=sflag, size = 0x4, scoped, tag = 'scoped memory for tpu_custom_call.1']
    #allocation5 [shape = 'u8[8192]{0}', space=vmem, size = 0x2000, scoped, tag = 'output window, operand 0, single buffered']
    #allocation6 [shape = 'u8[8192]{0}', space=vmem, size = 0x2000, scoped, tag = 'output window, operand 1, single buffered']
    #allocation7 [shape = 's32[1]{0}', space=sflag, size = 0x4, scoped, tag = 'scoped memory for tpu_custom_call.1']
    %8 = vsyncpa [#allocation3], 0
    %9 = vsyncpa [#allocation4], 0
    %10 = vsyncpa [#allocation7], 0
    // Predicated region
    $region2: #{tpu_custom_call.1} parent=1 // pred_check
      _
    $region3: #{tpu_custom_call.1} parent=1 // pred_check_branch
      %12 = sbr.rel (0) target = $region5
    $region4: #{tpu_custom_call.1} parent=1 // pred_region
      %14 = vsyncadd [#allocation3], 0
      %s15 = sshll.u32 %s0, 4
      %s16 = int_to_ptr.hbm [resolvable:$true] %s15
      %s17 = sshll.u32 [#allocation2], 4
      %s18 = int_to_ptr.vmem [resolvable:$true] %s17
      %23 = dma.hbm_to_vmem [thread:$0]  %s16, 256, %s18, [#allocation3], 128, 128, 8
    $region5: #{tpu_custom_call.1} parent=1 // pred_fallthru
      _
    // Predicated region
    $region6: #{tpu_custom_call.1} parent=1 // pred_check
      _
    $region7: #{tpu_custom_call.1} parent=1 // pred_check_branch
      %25 = sbr.rel (0) target = $region9
    $region8: #{tpu_custom_call.1} parent=1 // pred_region
      %27 = dma.done [#allocation3], 256
    $region9: #{tpu_custom_call.1} parent=1 // pred_fallthru
      _
    %v28 = vld [vmem:[#allocation2] sm:$0xff]
    %v29 = vld [vmem:[#allocation2 + $0x8] sm:$0xff]
    %v30 = vlaneseq
    %v31 = vand.u32 %v30, 127
    %32 = vrot.lane.b32.xlu0 %v28, 2
    %v33 = vpop.permute.xlu0 %32
    %34 = vrot.lane.b32.xlu0 %v29, 2
    %v35 = vpop.permute.xlu0 %34
    %vm36 = vcmp.lt.s32.totalorder %v31, 2
    %38 = vset.pattern.permute.xlu0 0
    %39 = vperm.xlu0 %38, %v28
    %v40 = vpop.permute.xlu0 %39
    %43 = vset.pattern.permute.xlu0 0
    %44 = vperm.xlu0 %43, %v29
    %v45 = vpop.permute.xlu0 %44
    %v47 = vsel %vm36, %v40, %v33
    %v48 = vsel %vm36, %v45, %v35
    %vm49 = vcmp.ge.s32.totalorder %v31, 18
    %50 = vset.pattern.permute.xlu0 15
    %51 = vperm.xlu0 %50, %v28
    %v52 = vpop.permute.xlu0 %51
    %54 = vset.pattern.permute.xlu0 15
    %55 = vperm.xlu0 %54, %v29
    %v56 = vpop.permute.xlu0 %55
    %v58 = vsel %vm49, %v52, %v47
    %v59 = vsel %vm49, %v56, %v48
    %60 = vrot.lane.b32.xlu0 %v58, 127
    %v61 = vpop.permute.xlu0 %60
    %62 = vrot.lane.b32.xlu0 %v59, 127
    %v63 = vpop.permute.xlu0 %62
    %64 = vrot.lane.b32.xlu0 %v58, 126
    %v65 = vpop.permute.xlu0 %64
    %66 = vrot.lane.b32.xlu0 %v59, 126
    %v67 = vpop.permute.xlu0 %66
    %68 = vrot.lane.b32.xlu0 %v58, 125
    %v69 = vpop.permute.xlu0 %68
    %70 = vrot.lane.b32.xlu0 %v59, 125
    %v71 = vpop.permute.xlu0 %70
    %72 = vrot.lane.b32.xlu0 %v58, 124
    %v73 = vpop.permute.xlu0 %72
    %74 = vrot.lane.b32.xlu0 %v59, 124
    %v75 = vpop.permute.xlu0 %74
    %v76 = vadd.f32 %v58, %v73
    %v77 = vadd.f32 %v59, %v75
    %v78 = vadd.f32 %v76, %v61
    %v79 = vadd.f32 %v77, %v63
    %v80 = vadd.f32 %v78, %v65
    %v81 = vadd.f32 %v79, %v67
    %v82 = vadd.f32 %v80, %v69
    %v83 = vadd.f32 %v81, %v71
    %v84 = vmul.f32 %v82, 0.2
    %v85 = vmul.f32 %v83, 0.2
    %v86 = vsub.f32 %v28, %v84
    %v87 = vsub.f32 %v29, %v85
    %88 = vst [vmem:[#allocation5] sm:$0xff] %v86
    %89 = vst [vmem:[#allocation5 + $0x8] sm:$0xff] %v87
    %90 = vst [vmem:[#allocation6] sm:$0xff] %v84
    %91 = vst [vmem:[#allocation6 + $0x8] sm:$0xff] %v85
    // Predicated region
    $region10: #{tpu_custom_call.1} parent=1 // pred_check
      _
    $region11: #{tpu_custom_call.1} parent=1 // pred_check_branch
      %93 = sbr.rel (0) target = $region13
    $region12: #{tpu_custom_call.1} parent=1 // pred_region
      %95 = vsyncadd [#allocation4], 0
      %s96 = sshll.u32 [#allocation5], 4
      %s97 = int_to_ptr.vmem [resolvable:$true] %s96
      %s98 = sshll.u32 %s1, 4
      %s99 = int_to_ptr.hbm [resolvable:$true] %s98
      %104 = dma.vmem_to_hbm [thread:$0]  %s97, 256, %s99, [#allocation4], 128, 128, 8
    $region13: #{tpu_custom_call.1} parent=1 // pred_fallthru
      _
    // Predicated region
    $region14: #{tpu_custom_call.1} parent=1 // pred_check
      _
    $region15: #{tpu_custom_call.1} parent=1 // pred_check_branch
      %106 = sbr.rel (0) target = $region17
    $region16: #{tpu_custom_call.1} parent=1 // pred_region
      %108 = vsyncadd [#allocation7], 0
      %s109 = sshll.u32 [#allocation6], 4
      %s110 = int_to_ptr.vmem [resolvable:$true] %s109
      %s111 = sshll.u32 %s2, 4
      %s112 = int_to_ptr.hbm [resolvable:$true] %s111
      %117 = dma.vmem_to_hbm [thread:$0]  %s110, 256, %s112, [#allocation7], 128, 128, 8
    $region17: #{tpu_custom_call.1} parent=1 // pred_fallthru
      _
    // Predicated region
    $region18: #{tpu_custom_call.1} parent=1 // pred_check
      _
    $region19: #{tpu_custom_call.1} parent=1 // pred_check_branch
      %119 = sbr.rel (0) target = $region21
    $region20: #{tpu_custom_call.1} parent=1 // pred_region
      %121 = dma.done [#allocation4], 256
    $region21: #{tpu_custom_call.1} parent=1 // pred_fallthru
      _
    // Predicated region
    $region22: #{tpu_custom_call.1} parent=1 // pred_check
      _
    $region23: #{tpu_custom_call.1} parent=1 // pred_check_branch
      %123 = sbr.rel (0) target = $region25
    $region24: #{tpu_custom_call.1} parent=1 // pred_region
      %125 = dma.done [#allocation7], 256
    $region25: #{tpu_custom_call.1} parent=1 // pred_fallthru
      _
    %126 = vsyncpa [#allocation3], 1
    %127 = vsyncpa [#allocation4], 1
    %128 = vsyncpa [#allocation7], 1

</llo_original>
